<compile_context>
chip_gen: v6e
topology: v6e:2x2x1
jax: 0.10.0
libtpu: 0.0.40
codegen_flags: <defaults>
</compile_context>

<pallas_src>
import math

import jax
import jax.numpy as jnp
from jax import lax
from jax.experimental import pallas as pl
from jax.experimental.pallas import tpu as pltpu

EPS = 1e-12


# ------------------------- hardware-aware sizing knobs ------------------------

def _vmem_limit_bytes():
    """Generation-aware scoped-VMEM request (v7x: 64 MiB/TC, v5e/v6e: 128 MiB)."""
    cap = 128 * 1024 * 1024
    try:
        info = pltpu.get_tpu_info()
        cap = int(getattr(info, "vmem_capacity_bytes", cap) or cap)
    except Exception:
        pass
    return max(32 * 1024 * 1024, min(3 * cap // 4, 96 * 1024 * 1024))


def _round_up(n, m):
    return ((n + m - 1) // m) * m


def _pick_lane_tile(n_lanes, rows_per_step, max_tile=1024, budget_bytes=None):
    """Lane (last-dim) tile for streamed blocks: full extent when small, otherwise a
    multiple of 128 bounded by a VMEM budget for the double-buffered f32 blocks."""
    if budget_bytes is None:
        budget_bytes = _vmem_limit_bytes() // 4
    if n_lanes <= max_tile:
        return n_lanes                       # full-extent block is always legal
    t = max_tile
    while t > 128 and 2 * rows_per_step * t * 4 > budget_bytes:
        t -= 128
    return t


# ----------------------------- plain-JAX glue ---------------------------------

def _normalize(x, eps=EPS):
    # matches torch _normalize: x / max(||x||_2, eps)
    norm = jnp.maximum(jnp.sqrt(jnp.sum(x * x)), eps)
    return x / norm


def _conv2d(x, w, stride, padding, dilation):
    return lax.conv_general_dilated(
        x, w,
        window_strides=(stride, stride),
        padding=[(padding, padding), (padding, padding)],
        rhs_dilation=(dilation, dilation),
        dimension_numbers=("NCHW", "OIHW", "NCHW"),
        precision=lax.Precision.HIGHEST)


def _conv_transpose2d(u, w, stride, padding, dilation, v_shape):
    # F.conv_transpose2d is the adjoint (grad wrt input) of F.conv2d with the same
    # stride/padding/dilation -> exact semantics via vjp.
    _, vjp = jax.vjp(
        lambda x: _conv2d(x, w, stride, padding, dilation),
        jnp.zeros(v_shape, u.dtype),
    )
    return vjp(u)[0]


def _im2col(x, kH, kW, stride, padding, dilation):
    """x: (N, C, H, W) -> (C*kH*kW, N*Hout*Wout); rows (c, kh, kw), cols (n, ho, wo)."""
    N, C, H, W = x.shape
    Hout = (H + 2 * padding - dilation * (kH - 1) - 1) // stride + 1
    Wout = (W + 2 * padding - dilation * (kW - 1) - 1) // stride + 1
    xp = jnp.pad(x, ((0, 0), (0, 0), (padding, padding), (padding, padding)))
    cols = []
    for kh in range(kH):
        for kw in range(kW):
            patch = lax.slice(
                xp,
                (0, 0, kh * dilation, kw * dilation),
                (N, C,
                 kh * dilation + stride * (Hout - 1) + 1,
                 kw * dilation + stride * (Wout - 1) + 1),
                (1, 1, stride, stride),
            )  # (N, C, Hout, Wout)
            cols.append(patch)
    cols = jnp.stack(cols, axis=0)                 # (kH*kW, N, C, Ho, Wo)
    cols = jnp.transpose(cols, (2, 0, 1, 3, 4))    # (C, kH*kW, N, Ho, Wo)
    return cols.reshape(C * kH * kW, N * Hout * Wout), Hout, Wout


# -------------------- Pallas kernel 1: spectral norm + rescale ----------------

def _spectral_norm_scale(weight, u, v, stride, padding, dilation, eps=EPS):
    """sigma = sum(u * conv2d(v, weight)); return (weight/sigma if sigma>=eps else
    weight, sigma).  Per P-tile: y = W @ im2col(v) on the MXU, sigma accumulates as
    an SMEM scalar (no (Cout,K) scratch, no lane-contracting einsum); the weight is
    shipped once, rescaled in-kernel and emitted once.  Kept f32 for sigma accuracy."""
    Cout, Cin, kH, kW = weight.shape
    patches, Hout, Wout = _im2col(v, kH, kW, stride, padding, dilation)   # (K, P)
    K, P = patches.shape
    wmat = weight.reshape(Cout, K).astype(jnp.float32)
    u2 = u.reshape(Cout, Hout * Wout).astype(jnp.float32)
    patches = patches.astype(jnp.float32)

    tp = _pick_lane_tile(P, K + Cout)
    n_p = pl.cdiv(P, tp)
    needs_mask = (P % tp) != 0   # trace-time: mask only if the last tile is partial

    def kernel(wmat_ref, pat_ref, u_ref, out_w_ref, sigma_ref, sig_acc):
        p = pl.program_id(0)

        @pl.when(p == 0)
        def _init():
            sig_acc[0] = jnp.float32(0.0)

        # The big P-axis reduction runs on the MXU; only a scalar crosses tiles.
        y = jnp.dot(wmat_ref[...], pat_ref[...],
                    preferred_element_type=jnp.float32)          # (Cout, tp)
        prod = u_ref[...] * y
        if needs_mask:
            col = p * tp + lax.broadcasted_iota(jnp.int32, prod.shape, 1)
            prod = jnp.where(col < P, prod, 0.0)
        sig_acc[0] = sig_acc[0] + jnp.sum(prod)

        @pl.when(p == pl.num_programs(0) - 1)
        def _finalize():
            sigma = sig_acc[0]
            # one scalar reciprocal + broadcast multiply (no per-element divide)
            inv = jnp.where(sigma < eps, jnp.float32(1.0), 1.0 / sigma)
            out_w_ref[...] = wmat_ref[...] * inv
            sigma_ref[0] = sigma

    out_w, sigma = pl.pallas_call(
        kernel,
        out_shape=(
            jax.ShapeDtypeStruct((Cout, K), jnp.float32),
            jax.ShapeDtypeStruct((1,), jnp.float32),
        ),
        grid_spec=pltpu.PrefetchScalarGridSpec(
            num_scalar_prefetch=0,
            grid=(n_p,),
            in_specs=[
                pl.BlockSpec((Cout, K), lambda p: (0, 0)),    # weight: resident
                pl.BlockSpec((K, tp), lambda p: (0, p)),      # im2col(v) P-tile
                pl.BlockSpec((Cout, tp), lambda p: (0, p)),   # u P-tile
            ],
            out_specs=(
                pl.BlockSpec((Cout, K), lambda p: (0, 0)),    # scaled weight
                pl.BlockSpec(memory_space=pltpu.MemorySpace.SMEM),  # sigma scalar
            ),
            scratch_shapes=[pltpu.SMEM((1,), jnp.float32)],   # sigma accumulator
        ),
        compiler_params=pltpu.CompilerParams(
            dimension_semantics=("arbitrary",),               # P is a reduction axis
            vmem_limit_bytes=_vmem_limit_bytes(),
        ),
    )(wmat, patches, u2)

    return out_w.astype(weight.dtype).reshape(weight.shape), sigma[0]


# ---------- Pallas kernel 2: fused conv (in-kernel im2col) + BN + clip --------

def _bn_clip_scales(bias, running_mean, running_var, bn_eps, log_lipschitz, Cout):
    """Fold eval-mode BN (affine=False) + Lipschitz clip into per-channel (m, b)."""
    rv_eps = running_var.astype(jnp.float32) + bn_eps
    inv_std = lax.rsqrt(rv_eps)
    scale = jnp.sqrt(jnp.min(rv_eps))                      # min((rv + eps) ** 0.5)
    lip = jnp.minimum(1.0 / scale, jnp.exp(log_lipschitz))
    m = inv_std * scale * lip
    shift = -running_mean.astype(jnp.float32)
    if bias is not None:
        shift = shift + bias.astype(jnp.float32)
    b = shift * m
    return m.reshape(Cout, 1), b.reshape(Cout, 1)


def _conv_bn_clip_fused(x, weight, m, b, padding, dilation):
    """stride == 1 path: read the padded image once (bf16), build the kH*kW taps
    in-kernel, one (Cout,K)x(K,Ho*Wo) MXU matmul per batch element, lane-dense
    (N, Cout, Ho*Wo) output (no XLA im2col, no output transpose).  m folded into w."""
    N, Cin, H, W = x.shape
    Cout, _, kH, kW = weight.shape
    K = Cin * kH * kW
    Hp, Wp = H + 2 * padding, W + 2 * padding
    Ho = Hp - dilation * (kH - 1)
    Wo = Wp - dilation * (kW - 1)

    # pad once in XLA (cheap) -- the 9x im2col expansion happens in VMEM only.
    x_pad = jnp.pad(x, ((0, 0), (0, 0), (padding, padding),
                        (padding, padding))).astype(jnp.bfloat16)
    # weight rows ordered (kh, kw, ci) to match the in-kernel tap construction,
    # with the BN scale m folded in (epilogue = single add).
    wmat = (weight.astype(jnp.float32).transpose(0, 2, 3, 1).reshape(Cout, K) * m)
    wmat = wmat.astype(jnp.bfloat16)
    out_dtype = x.dtype

    def kernel(xp_ref, w_ref, b_ref, out_ref):
        rows = [xp_ref[0, :, r, :] for r in range(Hp)]            # (Cin, Wp) each
        cols = []
        for ho in range(Ho):
            pieces = []
            for kh in range(kH):
                row = rows[ho + kh * dilation]
                for kw in range(kW):
                    c0 = kw * dilation
                    pieces.append(row[:, c0:c0 + Wo])             # (Cin, Wo)
            cols.append(jnp.concatenate(pieces, axis=0))          # (K, Wo)
        rhs = jnp.concatenate(cols, axis=1)                       # (K, Ho*Wo) bf16
        conv = jnp.dot(w_ref[...], rhs,
                       preferred_element_type=jnp.float32)        # (Cout, Ho*Wo)
        out_ref[0] = (conv + b_ref[...]).astype(out_ref.dtype)

    out = pl.pallas_call(
        kernel,
        out_shape=jax.ShapeDtypeStruct((N, Cout, Ho * Wo), out_dtype),
        grid_spec=pltpu.PrefetchScalarGridSpec(
            num_scalar_prefetch=0,
            grid=(N,),
            in_specs=[
                pl.BlockSpec((1, Cin, Hp, Wp), lambda n: (n, 0, 0, 0)),  # padded image
                pl.BlockSpec((Cout, K), lambda n: (0, 0)),               # folded weight
                pl.BlockSpec((Cout, 1), lambda n: (0, 0)),               # BN/clip shift
            ],
            out_specs=pl.BlockSpec((1, Cout, Ho * Wo), lambda n: (n, 0, 0)),
        ),
        compiler_params=pltpu.CompilerParams(
            dimension_semantics=("parallel",),                 # independent batch items
            vmem_limit_bytes=_vmem_limit_bytes(),
        ),
    )(x_pad, wmat, b)

    return out.reshape(N, Cout, Ho, Wo)        # metadata-only reshape (no transpose)


def _conv_bn_clip_im2col(x, weight, m, b, stride, padding, dilation):
    """Fallback (stride > 1 or very large images): XLA-side im2col feeding the
    matmul kernel.  TODO(synk): extend the fused in-kernel im2col path to stride>1
    and row-tiled large images to drop this path's extra HBM traffic."""
    N, Cin, H, W = x.shape
    Cout, _, kH, kW = weight.shape
    xpat, Hout, Wout = _im2col(x, kH, kW, stride, padding, dilation)  # (K, N*Ho*Wo)
    K, NP = xpat.shape
    wmat = weight.astype(jnp.float32).reshape(Cout, K) * m            # m folded in
    xpat = xpat.astype(jnp.float32)

    def kernel(w_ref, xpat_ref, b_ref, out_ref):
        conv = jnp.dot(w_ref[...], xpat_ref[...],
                       preferred_element_type=jnp.float32)
        out_ref[...] = (conv + b_ref[...]).astype(out_ref.dtype)

    tc = _pick_lane_tile(NP, K + Cout)
    n_c = pl.cdiv(NP, tc)

    out_flat = pl.pallas_call(
        kernel,
        out_shape=jax.ShapeDtypeStruct((Cout, NP), jnp.float32),
        grid_spec=pltpu.PrefetchScalarGridSpec(
            num_scalar_prefetch=0,
            grid=(n_c,),
            in_specs=[
                pl.BlockSpec((Cout, K), lambda c: (0, 0)),   # weight: resident
                pl.BlockSpec((K, tc), lambda c: (0, c)),     # im2col(x) column tile
                pl.BlockSpec((Cout, 1), lambda c: (0, 0)),   # per-channel shift
            ],
            out_specs=pl.BlockSpec((Cout, tc), lambda c: (0, c)),
        ),
        compiler_params=pltpu.CompilerParams(
            dimension_semantics=("parallel",),
            vmem_limit_bytes=_vmem_limit_bytes(),
        ),
    )(wmat, xpat, b)

    out = out_flat.reshape(Cout, N, Hout, Wout).transpose(1, 0, 2, 3)
    return out.astype(x.dtype)


def _conv_bn_clip(x, weight, bias, running_mean, running_var, bn_eps,
                  log_lipschitz, stride, padding, dilation):
    N, Cin, H, W = x.shape
    Cout, _, kH, kW = weight.shape
    m, b = _bn_clip_scales(bias, running_mean, running_var, bn_eps,
                           log_lipschitz, Cout)
    if stride == 1:
        K = Cin * kH * kW
        Hp, Wp = H + 2 * padding, W + 2 * padding
        Ho = Hp - dilation * (kH - 1)
        Wo = Wp - dilation * (kW - 1)
        # rough per-step VMEM residency (bf16 image x2 buffers, bf16 rhs,
        # f32 conv + out x2, bf16 weight)
        need = (4 * Cin * Hp * Wp + 2 * K * Ho * Wo + 12 * Cout * Ho * Wo
                + 2 * Cout * K)
        if Ho <= 64 and Ho * Wo <= 8192 and need < _vmem_limit_bytes() // 2:
            return _conv_bn_clip_fused(x, weight, m, b, padding, dilation)
    return _conv_bn_clip_im2col(x, weight, m, b, stride, padding, dilation)


# ------------------------------- module ports ---------------------------------

def _as_int(v):
    return int(v[0]) if isinstance(v, (tuple, list)) else int(v)


class ConvSpectralNorm:
    """JAX/Pallas port of the PyTorch ConvSpectralNorm parametrization."""

    def __init__(self, weight, stride=1, dilation=1, padding=1, im_size=10,
                 n_power_iterations=1, eps=EPS, key=None):
        num_iterations_initial = 15
        self.im_size = im_size
        self.n_power_iterations = n_power_iterations
        self.eps = eps
        self.padding = _as_int(padding)
        self.stride = _as_int(stride)
        self.dilation = _as_int(dilation)

        if key is None:
            key = jax.random.PRNGKey(0)
        ku, kv = jax.random.split(key)
        Cout, Cin = weight.shape[0], weight.shape[1]
        self._u = _normalize(jax.random.normal(ku, (1, Cout, im_size, im_size),
                                               weight.dtype), eps=self.eps)
        self._v = _normalize(jax.random.normal(kv, (1, Cin, im_size, im_size),
                                               weight.dtype), eps=self.eps)
        self._power_method(weight, num_iterations_initial)

    def _power_method(self, weight, num_iterations):
        # buffer update (torch runs it under no_grad) -- plain-JAX init/training glue.
        # TODO(synk): conv_transpose2d has no dedicated Pallas kernel; it is the
        # adjoint of conv2d expressed via jax.vjp.
        for _ in range(num_iterations):
            self._v = _normalize(
                _conv_transpose2d(self._u, weight, self.stride, self.padding,
                                  self.dilation, self._v.shape), eps=self.eps)
            self._u = _normalize(
                _conv2d(self._v, weight, self.stride, self.padding, self.dilation),
                eps=self.eps)

    def forward(self, weight, training=False):
        if training:
            self._power_method(weight, self.n_power_iterations)
        return _spectral_norm_scale(weight, self._u, self._v, self.stride,
                                    self.padding, self.dilation, eps=self.eps)

    __call__ = forward


def convspectralnorm_wrapper(weight, im_size=10, n_power_iterations=1, *,
                             stride=1, dilation=1, padding=1, key=None):
    """JAX stand-in for the torch parametrization wrapper."""
    return ConvSpectralNorm(weight, stride=stride, dilation=dilation,
                            padding=padding, im_size=im_size,
                            n_power_iterations=n_power_iterations, key=key)


class ConvBNBlock:
    """JAX/Pallas port of ConvBNBlock.forward (eval-mode BatchNorm statistics)."""

    def __init__(self, in_channels, out_channels, padding=0, bias=False,
                 stride=1, kernel_size=3, init_lipschitz=math.inf,
                 conv_wrapper=None, clip_bn=None, key=None):
        if key is None:
            key = jax.random.PRNGKey(0)
        kw, kb, self._sn_key = jax.random.split(key, 3)

        fan_in = in_channels * kernel_size * kernel_size
        bound = 1.0 / math.sqrt(fan_in)
        self.weight = jax.random.uniform(
            kw, (out_channels, in_channels, kernel_size, kernel_size),
            jnp.float32, -bound, bound)
        self.bias = (jax.random.uniform(kb, (out_channels,), jnp.float32,
                                        -bound, bound) if bias else None)
        self.stride, self.padding, self.dilation = stride, padding, 1

        # BatchNorm2d(out_channels, affine=False) buffers.
        self.bn_eps = 1e-5
        self.running_mean = jnp.zeros((out_channels,), jnp.float32)
        self.running_var = jnp.ones((out_channels,), jnp.float32)

        self.log_lipschitz = jnp.log(jnp.float32(init_lipschitz))
        self.init_convspectralnorm = True
        self.conv_wrapper = conv_wrapper
        self.clip_bn = True      # the reference module hard-codes True
        self.spectral_norm = None
        self.sigma = None

    def forward(self, x, freeze_bn=False, weight=None, training=False):
        if self.conv_wrapper is not None and self.init_convspectralnorm:
            if self.conv_wrapper is convspectralnorm_wrapper:
                # lazy parametrization with im_size = x.size(2), as in the spec
                self.spectral_norm = convspectralnorm_wrapper(
                    self.weight, im_size=x.shape[2], stride=self.stride,
                    dilation=self.dilation, padding=self.padding,
                    key=self._sn_key)
            self.init_convspectralnorm = False

        if weight is None:
            w = self.weight
            if self.spectral_norm is not None:
                w, self.sigma = self.spectral_norm(self.weight, training=training)
        else:
            w = weight

        # TODO(synk): training-mode BatchNorm (batch statistics + running-stat
        # update) is not ported; this implements the eval-mode running-stats path.
        return _conv_bn_clip(x, w, self.bias, self.running_mean, self.running_var,
                             self.bn_eps, self.log_lipschitz,
                             self.stride, self.padding, self.dilation)

    __call__ = forward


# ---------------------------------- demo --------------------------------------

if __name__ == "__main__":
    key = jax.random.PRNGKey(0)
    k_block, k_x, k_rm, k_rv, k_w2, k_v2 = jax.random.split(key, 6)

    # ---- ConvBNBlock forward: spectral-norm parametrized conv + BN + clip ----
    N, Cin, H, W = 2, 4, 16, 16
    Cout, ksz, pad, stride = 4, 3, 1, 1

    block = ConvBNBlock(in_channels=Cin, out_channels=Cout, padding=pad,
                        bias=False, stride=stride, kernel_size=ksz,
                        init_lipschitz=0.5, conv_wrapper=convspectralnorm_wrapper,
                        key=k_block)
    # pretend-trained BatchNorm running statistics (deterministic)
    block.running_mean = 0.1 * jax.random.normal(k_rm, (Cout,), jnp.float32)
    block.running_var = jax.random.uniform(k_rv, (Cout,), jnp.float32, 0.5, 1.5)

    x = jax.random.normal(k_x, (N, Cin, H, W), jnp.float32)
    y = jax.block_until_ready(block(x))                 # eval-mode forward

    # reference: lax conv (f32) with the spectral-normalized weight + eval BN + clip
    sn = block.spectral_norm
    sigma_ref = jnp.sum(sn._u * _conv2d(sn._v, block.weight, stride, pad, 1))
    w_ref = jnp.where(sigma_ref < sn.eps, block.weight, block.weight / sigma_ref)
    conv_ref = _conv2d(x, w_ref, stride, pad, 1)
    inv_std = 1.0 / jnp.sqrt(block.running_var + block.bn_eps)
    bn_ref = ((conv_ref - block.running_mean[None, :, None, None])
              * inv_std[None, :, None, None])
    scale_ref = jnp.min(jnp.sqrt(block.running_var + block.bn_eps))
    y_ref = bn_ref * scale_ref * jnp.minimum(1.0 / scale_ref,
                                             jnp.exp(block.log_lipschitz))

    assert y.shape == y_ref.shape
    assert jnp.allclose(block.sigma, sigma_ref, rtol=1e-4, atol=1e-6)
    # bf16 MXU operands (f32 accumulation) loosen parity vs the f32 torch reference
    assert jnp.allclose(y, y_ref, rtol=2e-2, atol=5e-3)

    # ---- standalone spectral-norm check exercising the multi-tile masked path ----
    Cout2, Cin2, im2 = 8, 6, 34          # P = 1156 -> two P-tiles, partial last tile
    w2 = 0.2 * jax.random.normal(k_w2, (Cout2, Cin2, 3, 3), jnp.float32)
    v2 = _normalize(jax.random.normal(k_v2, (1, Cin2, im2, im2), jnp.float32))
    u2 = _normalize(_conv2d(v2, w2, 1, 1, 1))           # keeps sigma well away from 0
    w2_sn, sigma2 = _spectral_norm_scale(w2, u2, v2, stride=1, padding=1, dilation=1)
    w2_sn = jax.block_until_ready(w2_sn)
    sigma2_ref = jnp.sum(u2 * _conv2d(v2, w2, 1, 1, 1))
    w2_ref = jnp.where(sigma2_ref < EPS, w2, w2 / sigma2_ref)
    assert jnp.allclose(sigma2, sigma2_ref, rtol=1e-4, atol=1e-5)
    assert jnp.allclose(w2_sn, w2_ref, rtol=1e-4, atol=1e-5)

    print("KERNEL_OK")
</pallas_src>

<mosaic_0001>
module attributes {stable_mosaic.version = 11 : i64} {
  func.func @kernel(%arg0: i32, %arg1: memref<4x36xf32, #tpu.memory_space<vmem>>, %arg2: memref<36x256xf32, #tpu.memory_space<vmem>>, %arg3: memref<4x256xf32, #tpu.memory_space<vmem>>, %arg4: memref<4x36xf32, #tpu.memory_space<vmem>>, %arg5: memref<1xf32, #tpu.memory_space<smem>>, %arg6: memref<1xf32, #tpu.memory_space<smem>>) attributes {dimension_semantics = [#tpu.dimension_semantics<arbitrary>], iteration_bounds = array<i64: 1>, scalar_prefetch = 0 : i64, scratch_operands = 1 : i64, tpu.core_type = #tpu.core_type<tc>, window_params = [{pipeline_mode = #tpu.pipeline_mode<synchronous>, transform_indices = @transform_0, window_bounds = array<i64: 4, 36>}, {transform_indices = @transform_1, window_bounds = array<i64: 36, 256>}, {transform_indices = @transform_2, window_bounds = array<i64: 4, 256>}, {pipeline_mode = #tpu.pipeline_mode<synchronous>, transform_indices = @transform_3, window_bounds = array<i64: 4, 36>}, {transform_indices = @transform_4, window_bounds = array<i64: 1>}]} {
    %c0_i32 = arith.constant 0 : i32
    %0 = arith.cmpi eq, %arg0, %c0_i32 : i32
    %1 = arith.extui %0 : i1 to i32
    %c0_i32_0 = arith.constant 0 : i32
    %2 = arith.cmpi ne, %1, %c0_i32_0 : i32
    scf.if %2 {
      %cst_11 = arith.constant 0.000000e+00 : f32
      %c0_12 = arith.constant 0 : index
      %18 = memref.load %arg6[%c0_12] : memref<1xf32, #tpu.memory_space<smem>>
      memref.store %cst_11, %arg6[%c0_12] : memref<1xf32, #tpu.memory_space<smem>>
    } else {
    }
    %c0 = arith.constant 0 : index
    %c0_1 = arith.constant 0 : index
    %3 = vector.load %arg1[%c0, %c0_1] : memref<4x36xf32, #tpu.memory_space<vmem>>, vector<4x36xf32>
    %c0_2 = arith.constant 0 : index
    %c0_3 = arith.constant 0 : index
    %4 = vector.load %arg2[%c0_2, %c0_3] : memref<36x256xf32, #tpu.memory_space<vmem>>, vector<36x256xf32>
    %cst = arith.constant dense<0.000000e+00> : vector<4x256xf32>
    %5 = tpu.matmul %3, %4, %cst {dimension_numbers = #tpu.dot_dimension_numbers<[1], [0], [0], [1], [0, 0, 1, 1], [], []>} : vector<4x36xf32>, vector<36x256xf32>, vector<4x256xf32> -> vector<4x256xf32>
    %c0_4 = arith.constant 0 : index
    %c0_5 = arith.constant 0 : index
    %6 = vector.load %arg3[%c0_4, %c0_5] : memref<4x256xf32, #tpu.memory_space<vmem>>, vector<4x256xf32>
    %7 = arith.mulf %6, %5 : vector<4x256xf32>
    %c0_6 = arith.constant 0 : index
    %8 = memref.load %arg6[%c0_6] : memref<1xf32, #tpu.memory_space<smem>>
    %9 = vector.shape_cast %7 : vector<4x256xf32> to vector<1x4x256xf32>
    %cst_7 = arith.constant dense<0.000000e+00> : vector<1xf32>
    %10 = vector.multi_reduction <add>, %9, %cst_7 [1, 2] : vector<1x4x256xf32> to vector<1xf32>
    %11 = vector.shape_cast %10 : vector<1xf32> to vector<1x1x1xf32>
    %12 = vector.extract %11[0, 0, 0] : f32 from vector<1x1x1xf32>
    %13 = arith.addf %8, %12 : f32
    %c0_8 = arith.constant 0 : index
    %14 = memref.load %arg6[%c0_8] : memref<1xf32, #tpu.memory_space<smem>>
    memref.store %13, %arg6[%c0_8] : memref<1xf32, #tpu.memory_space<smem>>
    %c0_i32_9 = arith.constant 0 : i32
    %15 = arith.cmpi eq, %arg0, %c0_i32_9 : i32
    %16 = arith.extui %15 : i1 to i32
    %c0_i32_10 = arith.constant 0 : i32
    %17 = arith.cmpi ne, %16, %c0_i32_10 : i32
    scf.if %17 {
      %c0_11 = arith.constant 0 : index
      %18 = memref.load %arg6[%c0_11] : memref<1xf32, #tpu.memory_space<smem>>
      %cst_12 = arith.constant 9.99999996E-13 : f32
      %19 = arith.cmpf olt, %18, %cst_12 : f32
      %cst_13 = arith.constant 1.000000e+00 : f32
      %20 = arith.divf %cst_13, %18 : f32
      %cst_14 = arith.constant 1.000000e+00 : f32
      %21 = arith.select %19, %cst_14, %20 : f32
      %c0_15 = arith.constant 0 : index
      %c0_16 = arith.constant 0 : index
      %22 = vector.load %arg1[%c0_15, %c0_16] : memref<4x36xf32, #tpu.memory_space<vmem>>, vector<4x36xf32>
      %23 = vector.broadcast %21 : f32 to vector<4x36xf32>
      %24 = arith.mulf %22, %23 : vector<4x36xf32>
      %c0_17 = arith.constant 0 : index
      %c0_18 = arith.constant 0 : index
      %25 = vector.load %arg4[%c0_17, %c0_18] : memref<4x36xf32, #tpu.memory_space<vmem>>, vector<4x36xf32>
      tpu.vector_store %arg4[%c0_17, %c0_18], %24 {strides = array<i32>} : memref<4x36xf32, #tpu.memory_space<vmem>>, vector<4x36xf32>,
      %c0_19 = arith.constant 0 : index
      %26 = memref.load %arg5[%c0_19] : memref<1xf32, #tpu.memory_space<smem>>
      memref.store %18, %arg5[%c0_19] : memref<1xf32, #tpu.memory_space<smem>>
    } else {
    }
    return
  }
  func.func @transform_0(%arg0: i32) -> (i32, i32) {
    %c0_i32 = arith.constant 0 : i32
    %c0_i32_0 = arith.constant 0 : i32
    %c0_i32_1 = arith.constant 0 : i32
    return %c0_i32, %c0_i32_0 : i32, i32
  }
  func.func @transform_1(%arg0: i32) -> (i32, i32) {
    %c0_i32 = arith.constant 0 : i32
    %c0_i32_0 = arith.constant 0 : i32
    return %c0_i32, %arg0 : i32, i32
  }
  func.func @transform_2(%arg0: i32) -> (i32, i32) {
    %c0_i32 = arith.constant 0 : i32
    %c0_i32_0 = arith.constant 0 : i32
    return %c0_i32, %arg0 : i32, i32
  }
  func.func @transform_3(%arg0: i32) -> (i32, i32) {
    %c0_i32 = arith.constant 0 : i32
    %c0_i32_0 = arith.constant 0 : i32
    %c0_i32_1 = arith.constant 0 : i32
    return %c0_i32, %c0_i32_0 : i32, i32
  }
  func.func @transform_4(%arg0: i32) -> i32 {
    %c0_i32 = arith.constant 0 : i32
    %c0_i32_0 = arith.constant 0 : i32
    return %c0_i32 : i32
  }
}

</mosaic_0001>

<llo_original>
// kernel: tpu_custom_call.1
$region0: #{tpu_custom_call.1}
  #allocation0 [shape = 'u32[]', space=smem, size = 0x4, offset = 0x4, fixed_abs, tag = 'smem constant byte address 0x4 - core index']
  #allocation1 [shape = 'u32[144,128]{1,0:T(1,128)}', space=vmem, size = 0x12000, scoped, tag = 'internal scratch']
  #allocation2 [shape = 'f32[1]{0:T(128)}', space=smem, size = 0x200, scoped, tag = 'scratch operand']
  %s0 = inlined_call_operand.hbm [shape: f32[4,36], index: 0, kind: input, shape index: {}]
  %s1 = inlined_call_operand.hbm [shape: f32[36,256], index: 1, kind: input, shape index: {}]
  %s2 = inlined_call_operand.hbm [shape: f32[4,256], index: 2, kind: input, shape index: {}]
  %s3 = inlined_call_operand.hbm [shape: f32[4,36], index: 3, kind: output, shape index: {0}]
  %s4 = inlined_call_operand.hbm [shape: f32[1], index: 4, kind: output, shape index: {1}]
  %5 = xla_tuple %s3, %s4
  %s6 = sld [smem:[#allocation0]]
  $region50: #{tpu_custom_call.1} parent=0
    _
  %s8 = ssub.s32 1, %s6
  %s9 = scalar_select 0, %s8, %s6
  $region1: #{tpu_custom_call.1} parent=0
    #allocation3 [shape = 'u8[2048]{0}', space=vmem, size = 0x800, scoped, tag = 'input window, operand 0, single buffered']
    #allocation4 [shape = 's32[1]{0}', space=sflag, size = 0x4, scoped, tag = 'scoped memory for tpu_custom_call.1']
    #allocation5 [shape = 's32[1]{0}', space=sflag, size = 0x4, scoped, tag = 'scoped memory for tpu_custom_call.1']
    #allocation6 [shape = 's32[1]{0}', space=sflag, size = 0x4, scoped, tag = 'scoped memory for tpu_custom_call.1']
    #allocation7 [shape = 'u8[40960]{0}', space=vmem, size = 0xa000, scoped, tag = 'input window, operand 1, single buffered']
    #allocation8 [shape = 's32[1]{0}', space=sflag, size = 0x4, scoped, tag = 'scoped memory for tpu_custom_call.1']
    #allocation9 [shape = 'u8[4096]{0}', space=vmem, size = 0x1000, scoped, tag = 'input window, operand 2, single buffered']
    #allocation10 [shape = 'u8[2048]{0}', space=vmem, size = 0x800, scoped, tag = 'output window, operand 0, single buffered']
    #allocation11 [shape = 'u8[512]{0}', space=smem, size = 0x200, scoped, tag = 'output window, operand 1, single buffered']
    %10 = vsyncpa [#allocation4], 0
    %11 = vsyncpa [#allocation8], 0
    %12 = vsyncpa [#allocation5], 0
    %13 = vsyncpa [#allocation6], 0
    // Predicated region
    $region2: #{tpu_custom_call.1} parent=1 // pred_check
      _
    $region3: #{tpu_custom_call.1} parent=1 // pred_check_branch
      %15 = sbr.rel (0) target = $region5
    $region4: #{tpu_custom_call.1} parent=1 // pred_region
      %s17 = ssub.s32 64, 64
      %18 = vsyncadd [#allocation4], %s17
      %s20 = sshll.u32 [#allocation3], 4
      %s21 = int_to_ptr.vmem [resolvable:$true] %s20
      %23 = dma.hbm_to_vmem [thread:$0]  %s0, 64, %s21, [#allocation4]
    $region5: #{tpu_custom_call.1} parent=1 // pred_fallthru
      _
    // Predicated region
    $region6: #{tpu_custom_call.1} parent=1 // pred_check
      _
    $region7: #{tpu_custom_call.1} parent=1 // pred_check_branch
      %25 = sbr.rel (0) target = $region9
    $region8: #{tpu_custom_call.1} parent=1 // pred_region
      %s27 = ssub.s32 1280, 1280
      %28 = vsyncadd [#allocation8], %s27
      %s29 = sshll.u32 [#allocation7], 4
      %s30 = int_to_ptr.vmem [resolvable:$true] %s29
      %35 = dma.hbm_to_vmem [thread:$0]  %s1, 1280, %s30, [#allocation8], 256, 256, 16
    $region9: #{tpu_custom_call.1} parent=1 // pred_fallthru
      _
    // Predicated region
    $region10: #{tpu_custom_call.1} parent=1 // pred_check
      _
    $region11: #{tpu_custom_call.1} parent=1 // pred_check_branch
      %37 = sbr.rel (0) target = $region13
    $region12: #{tpu_custom_call.1} parent=1 // pred_region
      %s39 = ssub.s32 128, 128
      %40 = vsyncadd [#allocation8], %s39
      %s42 = sshll.u32 [#allocation9], 4
      %s43 = int_to_ptr.vmem [resolvable:$true] %s42
      %45 = dma.hbm_to_vmem [thread:$0]  %s2, 128, %s43, [#allocation8]
    $region13: #{tpu_custom_call.1} parent=1 // pred_fallthru
      _
    // Predicated region
    $region14: #{tpu_custom_call.1} parent=1 // pred_check
      _
    $region15: #{tpu_custom_call.1} parent=1 // pred_check_branch
      %47 = sbr.rel (0) target = $region17
    $region16: #{tpu_custom_call.1} parent=1 // pred_region
      %48 = dma.done [#allocation4], 64
    $region17: #{tpu_custom_call.1} parent=1 // pred_fallthru
      _
    // Predicated region
    $region18: #{tpu_custom_call.1} parent=1 // pred_check
      _
    $region19: #{tpu_custom_call.1} parent=1 // pred_check_branch
      %50 = sbr.rel (0) target = $region21
    $region20: #{tpu_custom_call.1} parent=1 // pred_region
      %51 = dma.done [#allocation8], 1280
    $region21: #{tpu_custom_call.1} parent=1 // pred_fallthru
      _
    // Predicated region
    $region22: #{tpu_custom_call.1} parent=1 // pred_check
      _
    $region23: #{tpu_custom_call.1} parent=1 // pred_check_branch
      %53 = sbr.rel (0) target = $region25
    $region24: #{tpu_custom_call.1} parent=1 // pred_region
      %54 = dma.done [#allocation8], 128
    $region25: #{tpu_custom_call.1} parent=1 // pred_fallthru
      _
    %p55 = scmp.eq.s32.totalorder 0, 0
    // Predicated region
    $region26: #{tpu_custom_call.1} parent=1 // pred_check
      %p56 = pneg %p55
    $region27: #{tpu_custom_call.1} parent=1 // pred_check_branch
      %58 = sbr.rel (%p56) target = $region29
    $region28: #{tpu_custom_call.1} parent=1 // pred_region
      %s59 = scalar_lea.smem [#allocation2], 0
      %60 = sst [smem:[%s59]] 0.0
    $region29: #{tpu_custom_call.1} parent=1 // pred_fallthru
      _
    %v61 = vld [vmem:[#allocation3] sm:$0xf]
    %v62 = vld [vmem:[#allocation7] sm:$0xff]
    %v63 = vld [vmem:[#allocation7 + $0x8] sm:$0xff]
    %v64 = vld [vmem:[#allocation7 + $0x10] sm:$0xff]
    %v65 = vld [vmem:[#allocation7 + $0x18] sm:$0xff]
    %v66 = vld [vmem:[#allocation7 + $0x20] sm:$0xff]
    %v67 = vld [vmem:[#allocation7 + $0x28] sm:$0xff]
    %v68 = vld [vmem:[#allocation7 + $0x30] sm:$0xff]
    %v69 = vld [vmem:[#allocation7 + $0x38] sm:$0xff]
    %v70 = vld [vmem:[#allocation7 + $0x40] sm:$0xf]
    %v71 = vld [vmem:[#allocation7 + $0x48] sm:$0xf]
    %vm72 = vcmask 293888
    %v74 = vsel %vm72, %v61, 0
    %vm76 = vcmask 1043456
    %v78 = vsel %vm76, %v70, 0
    %v81 = vsel %vm76, %v71, 0
    %83 = vmatprep.subr.mxu0 0.0
    %84 = vmatpush1.msra.mxu0 0.0
    %85 = vmatprep.subr.mxu0 0.0
    %86 = vmatpush1.msra.mxu0 0.0
    %87 = vmatprep.subr.mxu0 0.0
    %88 = vmatpush1.msra.mxu0 0.0
    %89 = vmatprep.subr.mxu0 0.0
    %90 = vmatpush1.msra.mxu0 0.0
    %91 = vmatprep.subr.mxu0 0.0
    %92 = vmatpush1.msra.mxu0 0.0
    %93 = vmatprep.subr.mxu0 0.0
    %94 = vmatpush1.msra.mxu0 0.0
    %95 = vmatprep.subr.mxu0 0.0
    %96 = vmatpush1.msra.mxu0 0.0
    %97 = vmatprep.subr.mxu0 0.0
    %98 = vmatpush1.msra.mxu0 0.0
    %99 = vmatprep.subr.mxu0 0.0
    %100 = vmatpush1.msra.mxu0 0.0
    %101 = vmatprep.subr.mxu0 0.0
    %102 = vmatpush1.msra.mxu0 0.0
    %103 = vmatprep.subr.mxu0 0.0
    %104 = vmatpush1.msra.mxu0 0.0
    %105 = vmatprep.subr.mxu0 %v81
    %106 = vmatpush1.msra.mxu0 %v78
    %107 = vmatprep.subr.mxu0 %v69
    %108 = vmatpush1.msra.mxu0 %v68
    %109 = vmatprep.subr.mxu0 %v67
    %110 = vmatpush1.msra.mxu0 %v66
    %111 = vmatprep.subr.mxu0 %v65
    %112 = vmatpush1.msra.mxu0 %v64
    %113 = vmatprep.subr.mxu0 %v63
    %114 = vmatpush1.msra.mxu0 %v62
    %115 = vmatprep.subr.mxu0 0.0
    %116 = vmatpush2.msra.mxu0 0.0
    %117 = vmatprep.subr.mxu0 0.0
    %118 = vmatpush2.msra.mxu0 0.0
    %119 = vmatprep.subr.mxu0 0.0
    %120 = vmatpush2.msra.mxu0 0.0
    %121 = vmatprep.subr.mxu0 0.0
    %122 = vmatpush2.msra.mxu0 0.0
    %123 = vmatprep.subr.mxu0 0.0
    %124 = vmatpush2.msra.mxu0 0.0
    %125 = vmatprep.subr.mxu0 0.0
    %126 = vmatpush2.msra.mxu0 0.0
    %127 = vmatprep.subr.mxu0 0.0
    %128 = vmatpush2.msra.mxu0 0.0
    %129 = vmatprep.subr.mxu0 0.0
    %130 = vmatpush2.msra.mxu0 0.0
    %131 = vmatprep.subr.mxu0 0.0
    %132 = vmatpush2.msra.mxu0 0.0
    %133 = vmatprep.subr.mxu0 0.0
    %134 = vmatpush2.msra.mxu0 0.0
    %135 = vmatprep.subr.mxu0 0.0
    %136 = vmatpush2.msra.mxu0 0.0
    %137 = vmatprep.subr.mxu0 0.0
    %138 = vmatpush2.msra.mxu0 0.0
    %139 = vmatprep.subr.mxu0 0.0
    %140 = vmatpush2.msra.mxu0 0.0
    %141 = vmatprep.subr.mxu0 0.0
    %142 = vmatpush2.msra.mxu0 0.0
    %143 = vmatprep.subr.mxu0 0.0
    %144 = vmatpush2.msra.mxu0 0.0
    %145 = vmatprep.subr.mxu0 0.0
    %146 = vmatpush2.msra.mxu0 0.0
    %147 = vmatprep.mubr.f32.mxu0 0.0
    %148 = vmatmul.mubr.f32.gmra.mxu0 %v74
    %v149 = vpop.f32.mrf.mxu0
    %v150 = vadd.f32 0.0, %v149
    %v151 = vpop.f32.mrf.mxu0
    %v152 = vadd.f32 0.0, %v151
    %153 = vdwg.mxu0
    %v154 = vld [vmem:[#allocation9] sm:$0xff]
    %v157 = vcombine.low %v150, %v152
    %v159 = vmul.f32 %v154, %v157
    %s160 = sld [smem:[#allocation2]]
    %v162 = vcombine.high %v159, %v159
    %v164 = vsel %vm76, %v159, 0.0
    %v165 = vsel %vm76, %v162, 0.0
    %v166 = vadd.f32 %v164, %v165
    %167 = vadd.xlane.f32.xlu0 %v166
    %v168 = vpop.xlane.xlu0 %167
    %v169 = vrot.slane %v168, 4
    %v170 = vadd.f32 %v168, %v169
    %v171 = vrot.slane %v170, 2
    %v172 = vadd.f32 %v170, %v171
    %v173 = vrot.slane %v172, 1
    %v174 = vadd.f32 %v172, %v173
    %s175 = vtos %v174
    %s176 = sadd.f32 %s160, %s175
    %s177 = scalar_lea.smem [#allocation2], 0
    %178 = sst [smem:[%s177]] %s176
    // Predicated region
    $region30: #{tpu_custom_call.1} parent=1 // pred_check
      %p179 = pneg %p55
    $region31: #{tpu_custom_call.1} parent=1 // pred_check_branch
      %181 = sbr.rel (%p179) target = $region33
    $region32: #{tpu_custom_call.1} parent=1 // pred_region
      %s182 = sld [smem:[#allocation2]]
      %p183 = scmp.lt.f32.partialorder %s182, 1e-12
      %v184 = vstv %s182
      %v185 = vrcp.pop %v184
      %s186 = vtos %v185
      %s187 = scalar_select %p183, 1.0, %s186
      %v188 = vld [vmem:[#allocation3] sm:$0xf]
      %v189 = vstv %s187
      %v190 = vmul.f32 %v188, %v189
      %vm191 = vcmask 289792
      %192 = vst.msk [vmem:[#allocation10] sm:$0xf] %vm191, %v190
      %s193 = scalar_lea.smem [#allocation11], 0
      %194 = sst [smem:[%s193]] %s182
    $region33: #{tpu_custom_call.1} parent=1 // pred_fallthru
      _
    // Predicated region
    $region34: #{tpu_custom_call.1} parent=1 // pred_check
      _
    $region35: #{tpu_custom_call.1} parent=1 // pred_check_branch
      %196 = sbr.rel (0) target = $region37
    $region36: #{tpu_custom_call.1} parent=1 // pred_region
      %s198 = ssub.s32 64, 64
      %199 = vsyncadd [#allocation5], %s198
      %s201 = sshll.u32 [#allocation10], 4
      %s202 = int_to_ptr.vmem [resolvable:$true] %s201
      %204 = dma.vmem_to_hbm [thread:$0]  %s202, 64, %s3, [#allocation5]
    $region37: #{tpu_custom_call.1} parent=1 // pred_fallthru
      _
    // Predicated region
    $region38: #{tpu_custom_call.1} parent=1 // pred_check
      _
    $region39: #{tpu_custom_call.1} parent=1 // pred_check_branch
      %206 = sbr.rel (0) target = $region41
    $region40: #{tpu_custom_call.1} parent=1 // pred_region
      %s208 = ssub.s32 16, 16
      %209 = vsyncadd [#allocation6], %s208
      %212 = dma.smem_to_hbm [#allocation11], 16, %s4, [#allocation6]
    $region41: #{tpu_custom_call.1} parent=1 // pred_fallthru
      _
    // Predicated region
    $region42: #{tpu_custom_call.1} parent=1 // pred_check
      _
    $region43: #{tpu_custom_call.1} parent=1 // pred_check_branch
      %214 = sbr.rel (0) target = $region45
    $region44: #{tpu_custom_call.1} parent=1 // pred_region
      %215 = dma.done [#allocation5], 64
    $region45: #{tpu_custom_call.1} parent=1 // pred_fallthru
      _
    // Predicated region
    $region46: #{tpu_custom_call.1} parent=1 // pred_check
      _
    $region47: #{tpu_custom_call.1} parent=1 // pred_check_branch
      %217 = sbr.rel (0) target = $region49
    $region48: #{tpu_custom_call.1} parent=1 // pred_region
      %218 = dma.done [#allocation6], 16
    $region49: #{tpu_custom_call.1} parent=1 // pred_fallthru
      _
    %219 = sfence
    %220 = vsyncpa [#allocation4], 1
    %221 = vsyncpa [#allocation8], 1
    %222 = vsyncpa [#allocation5], 1
    %223 = vsyncpa [#allocation6], 1

</llo_original>
